<compile_context>
chip_gen: v6e
topology: v6e:2x2x1
jax: 0.10.0
libtpu: 0.0.40
codegen_flags: <defaults>
</compile_context>

<pallas_src>
import functools

import jax
import jax.numpy as jnp
from jax.experimental import pallas as pl
from jax.experimental.pallas import tpu as pltpu

_LANE = 128     # TPU lane width
_SUBLANE = 8    # TPU sublane width


def _round_up(x, m):
    return ((x + m - 1) // m) * m


def _pooler_kernel(x_ref, wp_ref, bp_ref, wh_ref, bh_ref, latent_ref, rew_ref):
    """One row-tile: Linear + bias + ReLU projection, then fused reward heads.

    Rewards are stored transposed (Hs sublanes x tm lanes) so the write-back is
    lane-dense and tiny instead of a 128-lane f32 padded block per row.
    """
    # x streams in its native dtype; cast to bf16 on the VPU (idle in this kernel)
    # so the wrapper never materializes a casted / padded copy of x in HBM.
    x = x_ref[...].astype(jnp.bfloat16)
    h = jnp.dot(x, wp_ref[...], preferred_element_type=jnp.float32)
    latent = jnp.maximum(h + bp_ref[...], 0.0)           # Linear + ReLU (pooler_pipeline)
    lat_s = latent.astype(latent_ref.dtype)               # stored latent; dropout(eval)==id
    latent_ref[...] = lat_s

    # Reward heads see exactly the stored latent (PyTorch semantics). Head weights are
    # kept f32 in HBM (tiny) and cast to the latent dtype here; accumulation stays f32.
    r = jnp.dot(lat_s, wh_ref[...].astype(lat_s.dtype),
                preferred_element_type=jnp.float32)        # (tm, 128); cols >= H are 0
    r = r + bh_ref[...]                                    # lane-padded bias (0 beyond H)
    r_t = jnp.transpose(r)                                 # XLU transpose -> (128, tm)
    rew_ref[...] = r_t[: rew_ref.shape[0], :].astype(rew_ref.dtype)   # (Hs, tm) lane-dense


@functools.partial(jax.jit, static_argnames=("tm_max", "latent_dtype"))
def lswt_pooler_forward(hidden_states, wp_t, bp, wh_t, bh, *,
                        tm_max=2048, latent_dtype=jnp.bfloat16):
    """hidden_states: [B, S, D]. wp_t: [D, E], bp: [E], wh_t: [E, H], bh: [H].

    Returns (latent [B, S, E] in `latent_dtype`, rewards [B, S, H] f32).
    """
    B, S, D = hidden_states.shape
    E = wp_t.shape[1]
    H = wh_t.shape[1]
    M = B * S
    assert 1 <= H <= _LANE, "reward heads are fused into one 128-lane matmul"

    # ---- Row-tile selection -------------------------------------------------
    # Largest tile that fits VMEM; 128-row aligned whenever the grid has >1 step
    # (required for the lane-dense transposed rewards block and the (8,128) rule).
    # No wrapper-side padding: the grid uses cdiv and Pallas masks the ragged tail,
    # so the outputs are exactly (M, E) / (Hs, M) and no [:M] slice pass is needed.
    tm_cap = max(_LANE, (int(tm_max) // _LANE) * _LANE)
    if M < 2 * _LANE:
        tm = M                                    # single full-extent block
    elif M <= tm_cap:
        tm = _round_up(pl.cdiv(M, 2), _LANE)      # >=2 steps so v7x's 2 TCs both get work
    else:
        tm = tm_cap
    grid_m = pl.cdiv(M, tm)

    x = hidden_states.reshape(M, D)               # metadata-only view; no cast, no pad

    wp_bf16 = wp_t.astype(jnp.bfloat16)           # tiny one-off weight casts only
    bp2 = bp.reshape(1, E).astype(jnp.float32)

    # Fused reward heads zero-padded to 128 output lanes for the MXU; the kernel stores
    # them transposed with Hs sublanes, so the HBM rewards buffer is only (Hs, M) f32.
    Hs = max(_SUBLANE, _round_up(H, _SUBLANE))
    wh_pad = jnp.zeros((E, _LANE), jnp.float32).at[:, :H].set(wh_t.astype(jnp.float32))
    bh_pad = jnp.zeros((1, _LANE), jnp.float32).at[:, :H].set(
        bh.reshape(1, H).astype(jnp.float32))

    lat_bytes = jnp.dtype(latent_dtype).itemsize
    # Double-buffered per-step VMEM footprint (+ margin for compiler scratch).
    tile_bytes = (tm * D * 4 + tm * E * lat_bytes + Hs * tm * 4
                  + D * E * 2 + E * _LANE * 4 + (E + _LANE) * 4)
    vmem_limit = int(min(96 * (1 << 20), 2 * tile_bytes + (8 << 20)))

    cost = pl.CostEstimate(
        flops=2 * M * D * E + 2 * M * E * _LANE,
        transcendentals=0,
        bytes_accessed=(M * D * 4                 # x read (native f32, single pass)
                        + M * E * lat_bytes       # latent write
                        + Hs * M * 4              # transposed rewards write
                        + D * E * 2               # projection weight (bf16)
                        + E * _LANE * 4           # head weights (f32)
                        + (E + _LANE) * 4),       # biases
    )

    latent, rew_t = pl.pallas_call(
        _pooler_kernel,
        out_shape=(
            jax.ShapeDtypeStruct((M, E), latent_dtype),
            jax.ShapeDtypeStruct((Hs, M), jnp.float32),
        ),
        grid_spec=pltpu.PrefetchScalarGridSpec(
            num_scalar_prefetch=0,
            grid=(grid_m,),
            in_specs=[
                pl.BlockSpec((tm, D), lambda i: (i, 0)),      # x row tile (f32)
                pl.BlockSpec((D, E), lambda i: (0, 0)),       # projection weight (resident)
                pl.BlockSpec((1, E), lambda i: (0, 0)),       # projection bias
                pl.BlockSpec((E, _LANE), lambda i: (0, 0)),   # fused head weights (f32)
                pl.BlockSpec((1, _LANE), lambda i: (0, 0)),   # fused head biases
            ],
            out_specs=[
                pl.BlockSpec((tm, E), lambda i: (i, 0)),      # latent_states
                pl.BlockSpec((Hs, tm), lambda i: (0, i)),     # rewards, transposed lane-dense
            ],
        ),
        compiler_params=pltpu.CompilerParams(
            dimension_semantics=("parallel",),
            vmem_limit_bytes=vmem_limit,
        ),
        cost_estimate=cost,
    )(x, wp_bf16, bp2, wh_pad, bh_pad)
    # TODO(synk): at production d_model/embedding_size on v7x (64 MiB VMEM) the resident
    # (D, E) weight should be single-buffered or K-tiled over D with an f32 accumulator.

    latent = latent.reshape(B, S, E)                         # contiguous -> no copy
    rewards = jnp.transpose(rew_t[:H, :]).reshape(B, S, H)   # tiny (H, M) transpose
    return latent, rewards


def _torch_linear_init(key, out_features, in_features):
    """Deterministic stand-in for torch.nn.Linear default init (U[-1/sqrt(in), 1/sqrt(in)])."""
    kw, kb = jax.random.split(key)
    bound = 1.0 / jnp.sqrt(jnp.float32(in_features))
    w = jax.random.uniform(kw, (out_features, in_features), jnp.float32, -bound, bound)
    b = jax.random.uniform(kb, (out_features,), jnp.float32, -bound, bound)
    return w, b


if __name__ == "__main__":
    # Small config consistent with the module:
    #   d_model=128, embedding_size=256, reward_heads=('helpfulness','correctness'),
    #   pooler_function='projection', reward_activation='relu', enable_bias=True,
    #   reward_head_bias=True, embedding_dropout=0.0 (eval).
    B, S, D, E = 2, 64, 128, 256
    head_names = ("helpfulness", "correctness")
    H = len(head_names)

    key = jax.random.PRNGKey(0)
    k_x, k_proj, *k_heads = jax.random.split(key, 2 + H)

    hidden_states = jax.random.normal(k_x, (B, S, D), jnp.float32)

    # pooler_pipeline Linear(d_model, embedding_size): torch weight [E, D], bias [E]
    w_proj, b_proj = _torch_linear_init(k_proj, E, D)

    # reward heads: one Linear(embedding_size, 1) per name; stack to [H, E] / [H]
    head_params = [_torch_linear_init(k, 1, E) for k in k_heads]
    w_heads = jnp.concatenate([w for w, _ in head_params], axis=0)   # [H, E]
    b_heads = jnp.concatenate([b for _, b in head_params], axis=0)   # [H]

    # Pre-transpose torch [out, in] -> kernel [in, out]
    wp_t = w_proj.T            # [D, E]
    wh_t = w_heads.T           # [E, H]

    latent, rewards_fused = lswt_pooler_forward(hidden_states, wp_t, b_proj, wh_t, b_heads)
    jax.block_until_ready((latent, rewards_fused))

    # DPHOutput-style result: dict of per-head rewards shaped [B, S, 1]
    rewards = {name: rewards_fused[..., i:i + 1] for i, name in enumerate(head_names)}

    # Reference matching the kernel's precision recipe (bf16 operands, f32 accumulation,
    # heads consume the stored bf16 latent).
    x_bf = hidden_states.astype(jnp.bfloat16)
    lat_f32 = jnp.maximum(
        jnp.einsum("bsd,de->bse", x_bf, wp_t.astype(jnp.bfloat16),
                   preferred_element_type=jnp.float32) + b_proj, 0.0)
    lat_ref = lat_f32.astype(jnp.bfloat16)
    rew_ref = jnp.einsum("bse,eh->bsh", lat_ref, wh_t.astype(jnp.bfloat16),
                         preferred_element_type=jnp.float32) + b_heads
    assert jnp.allclose(latent.astype(jnp.float32), lat_ref.astype(jnp.float32),
                        atol=1e-3, rtol=1e-3)
    assert jnp.allclose(rewards_fused, rew_ref, atol=1e-3, rtol=1e-3)

    # Loose check against the pure-f32 PyTorch-semantics reference (bf16 rounding only).
    lat_full = jnp.maximum(hidden_states @ wp_t + b_proj, 0.0)
    rew_full = lat_full @ wh_t + b_heads
    assert jnp.allclose(latent.astype(jnp.float32), lat_full, atol=5e-2, rtol=5e-2)
    assert jnp.allclose(rewards_fused, rew_full, atol=5e-2, rtol=5e-2)
    assert rewards["helpfulness"].shape == (B, S, 1)
    assert rewards["correctness"].shape == (B, S, 1)

    # TODO(synk): 'sae' / gated-GLU pooler variants, aggregate_states token/layer pooling,
    # training-mode dropout, and compute_sae_loss aux losses are alternate config branches
    # not exercised by this ('projection', eval) forward.
    print("KERNEL_OK")
</pallas_src>

<mosaic_0001>
module attributes {stable_mosaic.version = 11 : i64} {
  func.func @_pooler_kernel(%arg0: i32, %arg1: memref<128x128xf32, #tpu.memory_space<vmem>>, %arg2: memref<128x256xbf16, #tpu.memory_space<vmem>>, %arg3: memref<1x256xf32, #tpu.memory_space<vmem>>, %arg4: memref<256x128xf32, #tpu.memory_space<vmem>>, %arg5: memref<1x128xf32, #tpu.memory_space<vmem>>, %arg6: memref<128x256xbf16, #tpu.memory_space<vmem>>, %arg7: memref<8x128xf32, #tpu.memory_space<vmem>>) attributes {dimension_semantics = [#tpu.dimension_semantics<parallel>], iteration_bounds = array<i64: 1>, scalar_prefetch = 0 : i64, scratch_operands = 0 : i64, tpu.core_type = #tpu.core_type<tc>, window_params = [{transform_indices = @transform_0, window_bounds = array<i64: 128, 128>}, {pipeline_mode = #tpu.pipeline_mode<synchronous>, transform_indices = @transform_1, window_bounds = array<i64: 128, 256>}, {pipeline_mode = #tpu.pipeline_mode<synchronous>, transform_indices = @transform_2, window_bounds = array<i64: 1, 256>}, {pipeline_mode = #tpu.pipeline_mode<synchronous>, transform_indices = @transform_3, window_bounds = array<i64: 256, 128>}, {pipeline_mode = #tpu.pipeline_mode<synchronous>, transform_indices = @transform_4, window_bounds = array<i64: 1, 128>}, {transform_indices = @transform_5, window_bounds = array<i64: 128, 256>}, {transform_indices = @transform_6, window_bounds = array<i64: 8, 128>}]} {
    %c0 = arith.constant 0 : index
    %c0_0 = arith.constant 0 : index
    %0 = vector.load %arg1[%c0, %c0_0] : memref<128x128xf32, #tpu.memory_space<vmem>>, vector<128x128xf32>
    %1 = arith.truncf %0 : vector<128x128xf32> to vector<128x128xbf16>
    %c0_1 = arith.constant 0 : index
    %c0_2 = arith.constant 0 : index
    %2 = vector.load %arg2[%c0_1, %c0_2] : memref<128x256xbf16, #tpu.memory_space<vmem>>, vector<128x256xbf16>
    %cst = arith.constant dense<0.000000e+00> : vector<128x256xf32>
    %3 = tpu.matmul %1, %2, %cst {dimension_numbers = #tpu.dot_dimension_numbers<[1], [0], [0], [1], [0, 0, 1, 1], [], []>} : vector<128x128xbf16>, vector<128x256xbf16>, vector<128x256xf32> -> vector<128x256xf32>
    %c0_3 = arith.constant 0 : index
    %c0_4 = arith.constant 0 : index
    %4 = vector.load %arg3[%c0_3, %c0_4] : memref<1x256xf32, #tpu.memory_space<vmem>>, vector<1x256xf32>
    %5 = vector.broadcast %4 : vector<1x256xf32> to vector<128x256xf32>
    %6 = arith.addf %3, %5 : vector<128x256xf32>
    %cst_5 = arith.constant 0.000000e+00 : f32
    %7 = vector.broadcast %cst_5 : f32 to vector<128x256xf32>
    %8 = arith.maximumf %6, %7 : vector<128x256xf32>
    %9 = arith.truncf %8 : vector<128x256xf32> to vector<128x256xbf16>
    %c0_6 = arith.constant 0 : index
    %c0_7 = arith.constant 0 : index
    %10 = vector.load %arg6[%c0_6, %c0_7] : memref<128x256xbf16, #tpu.memory_space<vmem>>, vector<128x256xbf16>
    tpu.vector_store %arg6[%c0_6, %c0_7], %9 {strides = array<i32>} : memref<128x256xbf16, #tpu.memory_space<vmem>>, vector<128x256xbf16>,
    %c0_8 = arith.constant 0 : index
    %c0_9 = arith.constant 0 : index
    %11 = vector.load %arg4[%c0_8, %c0_9] : memref<256x128xf32, #tpu.memory_space<vmem>>, vector<256x128xf32>
    %12 = arith.truncf %11 : vector<256x128xf32> to vector<256x128xbf16>
    %cst_10 = arith.constant dense<0.000000e+00> : vector<128x128xf32>
    %13 = tpu.matmul %9, %12, %cst_10 {dimension_numbers = #tpu.dot_dimension_numbers<[1], [0], [0], [1], [0, 0, 1, 1], [], []>} : vector<128x256xbf16>, vector<256x128xbf16>, vector<128x128xf32> -> vector<128x128xf32>
    %c0_11 = arith.constant 0 : index
    %c0_12 = arith.constant 0 : index
    %14 = vector.load %arg5[%c0_11, %c0_12] : memref<1x128xf32, #tpu.memory_space<vmem>>, vector<1x128xf32>
    %15 = vector.broadcast %14 : vector<1x128xf32> to vector<128x128xf32>
    %16 = arith.addf %13, %15 : vector<128x128xf32>
    %17 = tpu.transpose %16, [1, 0] : vector<128x128xf32> -> vector<128x128xf32>
    %18 = vector.extract_strided_slice %17 {offsets = [0, 0], sizes = [8, 128], strides = [1, 1]} : vector<128x128xf32> to vector<8x128xf32>
    %c0_13 = arith.constant 0 : index
    %c0_14 = arith.constant 0 : index
    %19 = vector.load %arg7[%c0_13, %c0_14] : memref<8x128xf32, #tpu.memory_space<vmem>>, vector<8x128xf32>
    tpu.vector_store %arg7[%c0_13, %c0_14], %18 {strides = array<i32>} : memref<8x128xf32, #tpu.memory_space<vmem>>, vector<8x128xf32>,
    return
  }
  func.func @transform_0(%arg0: i32) -> (i32, i32) {
    %c0_i32 = arith.constant 0 : i32
    %c0_i32_0 = arith.constant 0 : i32
    return %arg0, %c0_i32 : i32, i32
  }
  func.func @transform_1(%arg0: i32) -> (i32, i32) {
    %c0_i32 = arith.constant 0 : i32
    %c0_i32_0 = arith.constant 0 : i32
    %c0_i32_1 = arith.constant 0 : i32
    return %c0_i32, %c0_i32_0 : i32, i32
  }
  func.func @transform_2(%arg0: i32) -> (i32, i32) {
    %c0_i32 = arith.constant 0 : i32
    %c0_i32_0 = arith.constant 0 : i32
    %c0_i32_1 = arith.constant 0 : i32
    return %c0_i32, %c0_i32_0 : i32, i32
  }
  func.func @transform_3(%arg0: i32) -> (i32, i32) {
    %c0_i32 = arith.constant 0 : i32
    %c0_i32_0 = arith.constant 0 : i32
    %c0_i32_1 = arith.constant 0 : i32
    return %c0_i32, %c0_i32_0 : i32, i32
  }
  func.func @transform_4(%arg0: i32) -> (i32, i32) {
    %c0_i32 = arith.constant 0 : i32
    %c0_i32_0 = arith.constant 0 : i32
    %c0_i32_1 = arith.constant 0 : i32
    return %c0_i32, %c0_i32_0 : i32, i32
  }
  func.func @transform_5(%arg0: i32) -> (i32, i32) {
    %c0_i32 = arith.constant 0 : i32
    %c0_i32_0 = arith.constant 0 : i32
    return %arg0, %c0_i32 : i32, i32
  }
  func.func @transform_6(%arg0: i32) -> (i32, i32) {
    %c0_i32 = arith.constant 0 : i32
    %c0_i32_0 = arith.constant 0 : i32
    return %c0_i32, %arg0 : i32, i32
  }
}

</mosaic_0001>

<llo_original>
// kernel: lswt_pooler_forward.1
$region0: #{lswt_pooler_forward.1}
  #allocation0 [shape = 'u32[]', space=smem, size = 0x4, offset = 0x4, fixed_abs, tag = 'smem constant byte address 0x4 - core index']
  #allocation1 [shape = 'u32[144,128]{1,0:T(1,128)}', space=vmem, size = 0x12000, scoped, tag = 'internal scratch']
  %s0 = inlined_call_operand.vmem [shape: f32[128,128], index: 0, kind: input, shape index: {}]
  %s1 = inlined_call_operand.vmem [shape: bf16[128,256], index: 1, kind: input, shape index: {}]
  %s2 = inlined_call_operand.vmem [shape: f32[1,256], index: 2, kind: input, shape index: {}]
  %s3 = inlined_call_operand.vmem [shape: f32[256,128], index: 3, kind: input, shape index: {}]
  %s4 = inlined_call_operand.vmem [shape: f32[1,128], index: 4, kind: input, shape index: {}]
  %s5 = inlined_call_operand.hbm [shape: bf16[128,256], index: 5, kind: output, shape index: {0}]
  %s6 = inlined_call_operand.vmem [shape: f32[8,128], index: 6, kind: output, shape index: {1}]
  %7 = xla_tuple %s5, %s6
  %s8 = sld [smem:[#allocation0]]
  $region38: #{lswt_pooler_forward.1} parent=0
    _
  %s10 = ssub.s32 1, %s8
  %s11 = scalar_select 0, %s10, %s8
  $region1: #{lswt_pooler_forward.1} parent=0
    #allocation2 [shape = 'u8[65536]{0}', space=vmem, size = 0x10000, scoped, tag = 'output window, operand 0, single buffered']
    #allocation3 [shape = 's32[1]{0}', space=sflag, size = 0x4, scoped, tag = 'scoped memory for lswt_pooler_forward.1']
    %12 = vsyncpa [#allocation3], 0
    // Predicated region
    $region2: #{lswt_pooler_forward.1} parent=1 // pred_check
      _
    $region3: #{lswt_pooler_forward.1} parent=1 // pred_check_branch
      %14 = sbr.rel (0) target = $region5
    $region4: #{lswt_pooler_forward.1} parent=1 // pred_region
      _
    $region5: #{lswt_pooler_forward.1} parent=1 // pred_fallthru
      _
    // Predicated region
    $region6: #{lswt_pooler_forward.1} parent=1 // pred_check
      _
    $region7: #{lswt_pooler_forward.1} parent=1 // pred_check_branch
      %16 = sbr.rel (0) target = $region9
    $region8: #{lswt_pooler_forward.1} parent=1 // pred_region
      _
    $region9: #{lswt_pooler_forward.1} parent=1 // pred_fallthru
      _
    // Predicated region
    $region10: #{lswt_pooler_forward.1} parent=1 // pred_check
      _
    $region11: #{lswt_pooler_forward.1} parent=1 // pred_check_branch
      %18 = sbr.rel (0) target = $region13
    $region12: #{lswt_pooler_forward.1} parent=1 // pred_region
      _
    $region13: #{lswt_pooler_forward.1} parent=1 // pred_fallthru
      _
    // Predicated region
    $region14: #{lswt_pooler_forward.1} parent=1 // pred_check
      _
    $region15: #{lswt_pooler_forward.1} parent=1 // pred_check_branch
      %20 = sbr.rel (0) target = $region17
    $region16: #{lswt_pooler_forward.1} parent=1 // pred_region
      _
    $region17: #{lswt_pooler_forward.1} parent=1 // pred_fallthru
      _
    // Predicated region
    $region18: #{lswt_pooler_forward.1} parent=1 // pred_check
      _
    $region19: #{lswt_pooler_forward.1} parent=1 // pred_check_branch
      %22 = sbr.rel (0) target = $region21
    $region20: #{lswt_pooler_forward.1} parent=1 // pred_region
      _
    $region21: #{lswt_pooler_forward.1} parent=1 // pred_fallthru
      _
    %v24 = vld [vmem:[%s0] sm:$0xff]
    %v25 = vld [vmem:[%s0 + $0x8] sm:$0xff]
    %v26 = vld [vmem:[%s0 + $0x10] sm:$0xff]
    %v27 = vld [vmem:[%s0 + $0x18] sm:$0xff]
    %v28 = vld [vmem:[%s0 + $0x20] sm:$0xff]
    %v29 = vld [vmem:[%s0 + $0x28] sm:$0xff]
    %v30 = vld [vmem:[%s0 + $0x30] sm:$0xff]
    %v31 = vld [vmem:[%s0 + $0x38] sm:$0xff]
    %v32 = vld [vmem:[%s0 + $0x40] sm:$0xff]
    %v33 = vld [vmem:[%s0 + $0x48] sm:$0xff]
    %v34 = vld [vmem:[%s0 + $0x50] sm:$0xff]
    %v35 = vld [vmem:[%s0 + $0x58] sm:$0xff]
    %v36 = vld [vmem:[%s0 + $0x60] sm:$0xff]
    %v37 = vld [vmem:[%s0 + $0x68] sm:$0xff]
    %v38 = vld [vmem:[%s0 + $0x70] sm:$0xff]
    %v39 = vld [vmem:[%s0 + $0x78] sm:$0xff]
    %v40 = vpack.c.bf16 %v25, %v24
    %v41 = vpack.c.bf16 %v27, %v26
    %v42 = vpack.c.bf16 %v29, %v28
    %v43 = vpack.c.bf16 %v31, %v30
    %v44 = vpack.c.bf16 %v33, %v32
    %v45 = vpack.c.bf16 %v35, %v34
    %v46 = vpack.c.bf16 %v37, %v36
    %v47 = vpack.c.bf16 %v39, %v38
    %v48 = vld [vmem:[%s1] sm:$0xff]
    %v49 = vld [vmem:[%s1 + $0x8] sm:$0xff]
    %v50 = vld [vmem:[%s1 + $0x10] sm:$0xff]
    %v51 = vld [vmem:[%s1 + $0x18] sm:$0xff]
    %v52 = vld [vmem:[%s1 + $0x20] sm:$0xff]
    %v53 = vld [vmem:[%s1 + $0x28] sm:$0xff]
    %v54 = vld [vmem:[%s1 + $0x30] sm:$0xff]
    %v55 = vld [vmem:[%s1 + $0x38] sm:$0xff]
    %v56 = vld [vmem:[%s1 + $0x40] sm:$0xff]
    %v57 = vld [vmem:[%s1 + $0x48] sm:$0xff]
    %v58 = vld [vmem:[%s1 + $0x50] sm:$0xff]
    %v59 = vld [vmem:[%s1 + $0x58] sm:$0xff]
    %v60 = vld [vmem:[%s1 + $0x60] sm:$0xff]
    %v61 = vld [vmem:[%s1 + $0x68] sm:$0xff]
    %v62 = vld [vmem:[%s1 + $0x70] sm:$0xff]
    %v63 = vld [vmem:[%s1 + $0x78] sm:$0xff]
    %v64 = vld [vmem:[%s2] sm:$0x3]
    %v66 = vlaneseq
    %v67 = vshrl.u32 %v66, 7
    %v68 = vsub.s32 0, %v67
    %v69 = vrot.slane %v64, %v68
    %v70 = vlaneseq
    %v71 = vshrl.u32 %v70, 7
    %v72 = vsub.s32 1, %v71
    %v73 = vrot.slane %v64, %v72
    %v92 = vunpack.c.l.b16 %v48
    %v93 = vunpack.c.h.b16 %v48
    %v94 = vunpack.c.l.b16 %v49
    %v95 = vunpack.c.h.b16 %v49
    %v96 = vunpack.c.l.b16 %v50
    %v97 = vunpack.c.h.b16 %v50
    %v98 = vunpack.c.l.b16 %v51
    %v99 = vunpack.c.h.b16 %v51
    %v100 = vunpack.c.l.b16 %v52
    %v101 = vunpack.c.h.b16 %v52
    %v102 = vunpack.c.l.b16 %v53
    %v103 = vunpack.c.h.b16 %v53
    %v104 = vunpack.c.l.b16 %v54
    %v105 = vunpack.c.h.b16 %v54
    %v106 = vunpack.c.l.b16 %v55
    %v107 = vunpack.c.h.b16 %v55
    %v108 = vunpack.c.l.b16 %v56
    %v109 = vunpack.c.h.b16 %v56
    %v110 = vunpack.c.l.b16 %v57
    %v111 = vunpack.c.h.b16 %v57
    %v112 = vunpack.c.l.b16 %v58
    %v113 = vunpack.c.h.b16 %v58
    %v114 = vunpack.c.l.b16 %v59
    %v115 = vunpack.c.h.b16 %v59
    %v116 = vunpack.c.l.b16 %v60
    %v117 = vunpack.c.h.b16 %v60
    %v118 = vunpack.c.l.b16 %v61
    %v119 = vunpack.c.h.b16 %v61
    %v120 = vunpack.c.l.b16 %v62
    %v121 = vunpack.c.h.b16 %v62
    %v122 = vunpack.c.l.b16 %v63
    %v123 = vunpack.c.h.b16 %v63
    %v124 = vpack.c.b16 %v94, %v92
    %v125 = vpack.c.b16 %v95, %v93
    %v126 = vpack.c.b16 %v98, %v96
    %v127 = vpack.c.b16 %v99, %v97
    %v128 = vpack.c.b16 %v102, %v100
    %v129 = vpack.c.b16 %v103, %v101
    %v130 = vpack.c.b16 %v106, %v104
    %v131 = vpack.c.b16 %v107, %v105
    %v132 = vpack.c.b16 %v110, %v108
    %v133 = vpack.c.b16 %v111, %v109
    %v134 = vpack.c.b16 %v114, %v112
    %v135 = vpack.c.b16 %v115, %v113
    %v136 = vpack.c.b16 %v118, %v116
    %v137 = vpack.c.b16 %v119, %v117
    %v138 = vpack.c.b16 %v122, %v120
    %v139 = vpack.c.b16 %v123, %v121
    %156 = vmatprep.subr.bf16.mxu0 %v139
    %157 = vmatpush1.bf16.msra.mxu0 %v138
    %158 = vmatprep.subr.bf16.mxu0 %v137
    %159 = vmatpush1.bf16.msra.mxu0 %v136
    %160 = vmatprep.subr.bf16.mxu0 %v135
    %161 = vmatpush1.bf16.msra.mxu0 %v134
    %162 = vmatprep.subr.bf16.mxu0 %v133
    %163 = vmatpush1.bf16.msra.mxu0 %v132
    %164 = vmatprep.subr.bf16.mxu0 %v131
    %165 = vmatpush1.bf16.msra.mxu0 %v130
    %166 = vmatprep.subr.bf16.mxu0 %v129
    %167 = vmatpush1.bf16.msra.mxu0 %v128
    %168 = vmatprep.subr.bf16.mxu0 %v127
    %169 = vmatpush1.bf16.msra.mxu0 %v126
    %170 = vmatprep.subr.bf16.mxu0 %v125
    %171 = vmatpush1.bf16.msra.mxu0 %v124
    %172 = vmatprep.subr.bf16.mxu0 0
    %173 = vmatpush2.bf16.msra.mxu0 0
    %174 = vmatprep.subr.bf16.mxu0 0
    %175 = vmatpush2.bf16.msra.mxu0 0
    %176 = vmatprep.subr.bf16.mxu0 0
    %177 = vmatpush2.bf16.msra.mxu0 0
    %178 = vmatprep.subr.bf16.mxu0 0
    %179 = vmatpush2.bf16.msra.mxu0 0
    %180 = vmatprep.subr.bf16.mxu0 0
    %181 = vmatpush2.bf16.msra.mxu0 0
    %182 = vmatprep.subr.bf16.mxu0 0
    %183 = vmatpush2.bf16.msra.mxu0 0
    %184 = vmatprep.subr.bf16.mxu0 0
    %185 = vmatpush2.bf16.msra.mxu0 0
    %186 = vmatprep.subr.bf16.mxu0 0
    %187 = vmatpush2.bf16.msra.mxu0 0
    %188 = vmatprep.mubr.bf16.mxu0 0
    %189 = vmatmul.mubr.bf16.gmra.mxu0 %v40
    %v190 = vpop.f32.mrf.mxu0
    %v191 = vadd.f32 %v69, %v190
    %v192 = vpop.f32.mrf.mxu0
    %v193 = vadd.f32 %v73, %v192
    %v194 = vpop.f32.mrf.mxu0
    %v195 = vadd.f32 %v69, %v194
    %v196 = vpop.f32.mrf.mxu0
    %v197 = vadd.f32 %v73, %v196
    %198 = vmatprep.mubr.bf16.mxu0 0
    %199 = vmatmul.mubr.bf16.gmra.mxu0 %v41
    %v200 = vpop.f32.mrf.mxu0
    %v201 = vadd.f32 %v69, %v200
    %v202 = vpop.f32.mrf.mxu0
    %v203 = vadd.f32 %v73, %v202
    %v204 = vpop.f32.mrf.mxu0
    %v205 = vadd.f32 %v69, %v204
    %v206 = vpop.f32.mrf.mxu0
    %v207 = vadd.f32 %v73, %v206
    %208 = vmatprep.mubr.bf16.mxu0 0
    %209 = vmatmul.mubr.bf16.gmra.mxu0 %v42
    %v210 = vpop.f32.mrf.mxu0
    %v211 = vadd.f32 %v69, %v210
    %v212 = vpop.f32.mrf.mxu0
    %v213 = vadd.f32 %v73, %v212
    %v214 = vpop.f32.mrf.mxu0
    %v215 = vadd.f32 %v69, %v214
    %v216 = vpop.f32.mrf.mxu0
    %v217 = vadd.f32 %v73, %v216
    %218 = vmatprep.mubr.bf16.mxu0 0
    %219 = vmatmul.mubr.bf16.gmra.mxu0 %v43
    %v220 = vpop.f32.mrf.mxu0
    %v221 = vadd.f32 %v69, %v220
    %v222 = vpop.f32.mrf.mxu0
    %v223 = vadd.f32 %v73, %v222
    %v224 = vpop.f32.mrf.mxu0
    %v225 = vadd.f32 %v69, %v224
    %v226 = vpop.f32.mrf.mxu0
    %v227 = vadd.f32 %v73, %v226
    %228 = vmatprep.mubr.bf16.mxu0 0
    %229 = vmatmul.mubr.bf16.gmra.mxu0 %v44
    %v230 = vpop.f32.mrf.mxu0
    %v231 = vadd.f32 %v69, %v230
    %v232 = vpop.f32.mrf.mxu0
    %v233 = vadd.f32 %v73, %v232
    %v234 = vpop.f32.mrf.mxu0
    %v235 = vadd.f32 %v69, %v234
    %v236 = vpop.f32.mrf.mxu0
    %v237 = vadd.f32 %v73, %v236
    %238 = vmatprep.mubr.bf16.mxu0 0
    %239 = vmatmul.mubr.bf16.gmra.mxu0 %v45
    %v240 = vpop.f32.mrf.mxu0
    %v241 = vadd.f32 %v69, %v240
    %v242 = vpop.f32.mrf.mxu0
    %v243 = vadd.f32 %v73, %v242
    %v244 = vpop.f32.mrf.mxu0
    %v245 = vadd.f32 %v69, %v244
    %v246 = vpop.f32.mrf.mxu0
    %v247 = vadd.f32 %v73, %v246
    %248 = vmatprep.mubr.bf16.mxu0 0
    %249 = vmatmul.mubr.bf16.gmra.mxu0 %v46
    %v250 = vpop.f32.mrf.mxu0
    %v251 = vadd.f32 %v69, %v250
    %v252 = vpop.f32.mrf.mxu0
    %v253 = vadd.f32 %v73, %v252
    %v254 = vpop.f32.mrf.mxu0
    %v255 = vadd.f32 %v69, %v254
    %v256 = vpop.f32.mrf.mxu0
    %v257 = vadd.f32 %v73, %v256
    %258 = vmatprep.mubr.bf16.mxu0 0
    %259 = vmatmul.mubr.bf16.gmra.mxu0 %v47
    %v260 = vpop.f32.mrf.mxu0
    %v261 = vadd.f32 %v69, %v260
    %v262 = vpop.f32.mrf.mxu0
    %v263 = vadd.f32 %v73, %v262
    %v264 = vpop.f32.mrf.mxu0
    %v265 = vadd.f32 %v69, %v264
    %v266 = vpop.f32.mrf.mxu0
    %v267 = vadd.f32 %v73, %v266
    %268 = vdwg.mxu0
    %v269 = vmax.f32 %v191, 0.0
    %v270 = vmax.f32 %v193, 0.0
    %v271 = vmax.f32 %v195, 0.0
    %v272 = vmax.f32 %v197, 0.0
    %v273 = vmax.f32 %v201, 0.0
    %v274 = vmax.f32 %v203, 0.0
    %v275 = vmax.f32 %v205, 0.0
    %v276 = vmax.f32 %v207, 0.0
    %v277 = vmax.f32 %v211, 0.0
    %v278 = vmax.f32 %v213, 0.0
    %v279 = vmax.f32 %v215, 0.0
    %v280 = vmax.f32 %v217, 0.0
    %v281 = vmax.f32 %v221, 0.0
    %v282 = vmax.f32 %v223, 0.0
    %v283 = vmax.f32 %v225, 0.0
    %v284 = vmax.f32 %v227, 0.0
    %v285 = vmax.f32 %v231, 0.0
    %v286 = vmax.f32 %v233, 0.0
    %v287 = vmax.f32 %v235, 0.0
    %v288 = vmax.f32 %v237, 0.0
    %v289 = vmax.f32 %v241, 0.0
    %v290 = vmax.f32 %v243, 0.0
    %v291 = vmax.f32 %v245, 0.0
    %v292 = vmax.f32 %v247, 0.0
    %v293 = vmax.f32 %v251, 0.0
    %v294 = vmax.f32 %v253, 0.0
    %v295 = vmax.f32 %v255, 0.0
    %v296 = vmax.f32 %v257, 0.0
    %v297 = vmax.f32 %v261, 0.0
    %v298 = vmax.f32 %v263, 0.0
    %v299 = vmax.f32 %v265, 0.0
    %v300 = vmax.f32 %v267, 0.0
    %v301 = vpack.c.bf16 %v271, %v269
    %v302 = vpack.c.bf16 %v272, %v270
    %v303 = vpack.c.bf16 %v275, %v273
    %v304 = vpack.c.bf16 %v276, %v274
    %v305 = vpack.c.bf16 %v279, %v277
    %v306 = vpack.c.bf16 %v280, %v278
    %v307 = vpack.c.bf16 %v283, %v281
    %v308 = vpack.c.bf16 %v284, %v282
    %v309 = vpack.c.bf16 %v287, %v285
    %v310 = vpack.c.bf16 %v288, %v286
    %v311 = vpack.c.bf16 %v291, %v289
    %v312 = vpack.c.bf16 %v292, %v290
    %v313 = vpack.c.bf16 %v295, %v293
    %v314 = vpack.c.bf16 %v296, %v294
    %v315 = vpack.c.bf16 %v299, %v297
    %v316 = vpack.c.bf16 %v300, %v298
    %v333 = vunpack.c.l.b16 %v301
    %v334 = vunpack.c.l.b16 %v302
    %v335 = vunpack.c.h.b16 %v301
    %v336 = vunpack.c.h.b16 %v302
    %v337 = vunpack.c.l.b16 %v303
    %v338 = vunpack.c.l.b16 %v304
    %v339 = vunpack.c.h.b16 %v303
    %v340 = vunpack.c.h.b16 %v304
    %v341 = vunpack.c.l.b16 %v305
    %v342 = vunpack.c.l.b16 %v306
    %v343 = vunpack.c.h.b16 %v305
    %v344 = vunpack.c.h.b16 %v306
    %v345 = vunpack.c.l.b16 %v307
    %v346 = vunpack.c.l.b16 %v308
    %v347 = vunpack.c.h.b16 %v307
    %v348 = vunpack.c.h.b16 %v308
    %v349 = vunpack.c.l.b16 %v309
    %v350 = vunpack.c.l.b16 %v310
    %v351 = vunpack.c.h.b16 %v309
    %v352 = vunpack.c.h.b16 %v310
    %v353 = vunpack.c.l.b16 %v311
    %v354 = vunpack.c.l.b16 %v312
    %v355 = vunpack.c.h.b16 %v311
    %v356 = vunpack.c.h.b16 %v312
    %v357 = vunpack.c.l.b16 %v313
    %v358 = vunpack.c.l.b16 %v314
    %v359 = vunpack.c.h.b16 %v313
    %v360 = vunpack.c.h.b16 %v314
    %v361 = vunpack.c.l.b16 %v315
    %v362 = vunpack.c.l.b16 %v316
    %v363 = vunpack.c.h.b16 %v315
    %v364 = vunpack.c.h.b16 %v316
    %v365 = vpack.c.b16 %v334, %v333
    %v366 = vpack.c.b16 %v336, %v335
    %v367 = vpack.c.b16 %v338, %v337
    %v368 = vpack.c.b16 %v340, %v339
    %v369 = vpack.c.b16 %v342, %v341
    %v370 = vpack.c.b16 %v344, %v343
    %v371 = vpack.c.b16 %v346, %v345
    %v372 = vpack.c.b16 %v348, %v347
    %v373 = vpack.c.b16 %v350, %v349
    %v374 = vpack.c.b16 %v352, %v351
    %v375 = vpack.c.b16 %v354, %v353
    %v376 = vpack.c.b16 %v356, %v355
    %v377 = vpack.c.b16 %v358, %v357
    %v378 = vpack.c.b16 %v360, %v359
    %v379 = vpack.c.b16 %v362, %v361
    %v380 = vpack.c.b16 %v364, %v363
    %397 = vst [vmem:[#allocation2] sm:$0xff] %v365
    %398 = vst [vmem:[#allocation2 + $0x8] sm:$0xff] %v366
    %399 = vst [vmem:[#allocation2 + $0x10] sm:$0xff] %v367
    %400 = vst [vmem:[#allocation2 + $0x18] sm:$0xff] %v368
    %401 = vst [vmem:[#allocation2 + $0x20] sm:$0xff] %v369
    %402 = vst [vmem:[#allocation2 + $0x28] sm:$0xff] %v370
    %403 = vst [vmem:[#allocation2 + $0x30] sm:$0xff] %v371
    %404 = vst [vmem:[#allocation2 + $0x38] sm:$0xff] %v372
    %405 = vst [vmem:[#allocation2 + $0x40] sm:$0xff] %v373
    %406 = vst [vmem:[#allocation2 + $0x48] sm:$0xff] %v374
    %407 = vst [vmem:[#allocation2 + $0x50] sm:$0xff] %v375
    %408 = vst [vmem:[#allocation2 + $0x58] sm:$0xff] %v376
    %409 = vst [vmem:[#allocation2 + $0x60] sm:$0xff] %v377
    %410 = vst [vmem:[#allocation2 + $0x68] sm:$0xff] %v378
    %411 = vst [vmem:[#allocation2 + $0x70] sm:$0xff] %v379
    %412 = vst [vmem:[#allocation2 + $0x78] sm:$0xff] %v380
    %v413 = vld [vmem:[%s3] sm:$0xff]
    %v414 = vld [vmem:[%s3 + $0x8] sm:$0xff]
    %v415 = vld [vmem:[%s3 + $0x10] sm:$0xff]
    %v416 = vld [vmem:[%s3 + $0x18] sm:$0xff]
    %v417 = vld [vmem:[%s3 + $0x20] sm:$0xff]
    %v418 = vld [vmem:[%s3 + $0x28] sm:$0xff]
    %v419 = vld [vmem:[%s3 + $0x30] sm:$0xff]
    %v420 = vld [vmem:[%s3 + $0x38] sm:$0xff]
    %v421 = vld [vmem:[%s3 + $0x40] sm:$0xff]
    %v422 = vld [vmem:[%s3 + $0x48] sm:$0xff]
    %v423 = vld [vmem:[%s3 + $0x50] sm:$0xff]
    %v424 = vld [vmem:[%s3 + $0x58] sm:$0xff]
    %v425 = vld [vmem:[%s3 + $0x60] sm:$0xff]
    %v426 = vld [vmem:[%s3 + $0x68] sm:$0xff]
    %v427 = vld [vmem:[%s3 + $0x70] sm:$0xff]
    %v428 = vld [vmem:[%s3 + $0x78] sm:$0xff]
    %v429 = vld [vmem:[%s3 + $0x80] sm:$0xff]
    %v430 = vld [vmem:[%s3 + $0x88] sm:$0xff]
    %v431 = vld [vmem:[%s3 + $0x90] sm:$0xff]
    %v432 = vld [vmem:[%s3 + $0x98] sm:$0xff]
    %v433 = vld [vmem:[%s3 + $0xa0] sm:$0xff]
    %v434 = vld [vmem:[%s3 + $0xa8] sm:$0xff]
    %v435 = vld [vmem:[%s3 + $0xb0] sm:$0xff]
    %v436 = vld [vmem:[%s3 + $0xb8] sm:$0xff]
    %v437 = vld [vmem:[%s3 + $0xc0] sm:$0xff]
    %v438 = vld [vmem:[%s3 + $0xc8] sm:$0xff]
    %v439 = vld [vmem:[%s3 + $0xd0] sm:$0xff]
    %v440 = vld [vmem:[%s3 + $0xd8] sm:$0xff]
    %v441 = vld [vmem:[%s3 + $0xe0] sm:$0xff]
    %v442 = vld [vmem:[%s3 + $0xe8] sm:$0xff]
    %v443 = vld [vmem:[%s3 + $0xf0] sm:$0xff]
    %v444 = vld [vmem:[%s3 + $0xf8] sm:$0xff]
    %v445 = vpack.c.bf16 %v414, %v413
    %v446 = vpack.c.bf16 %v416, %v415
    %v447 = vpack.c.bf16 %v418, %v417
    %v448 = vpack.c.bf16 %v420, %v419
    %v449 = vpack.c.bf16 %v422, %v421
    %v450 = vpack.c.bf16 %v424, %v423
    %v451 = vpack.c.bf16 %v426, %v425
    %v452 = vpack.c.bf16 %v428, %v427
    %v453 = vpack.c.bf16 %v430, %v429
    %v454 = vpack.c.bf16 %v432, %v431
    %v455 = vpack.c.bf16 %v434, %v433
    %v456 = vpack.c.bf16 %v436, %v435
    %v457 = vpack.c.bf16 %v438, %v437
    %v458 = vpack.c.bf16 %v440, %v439
    %v459 = vpack.c.bf16 %v442, %v441
    %v460 = vpack.c.bf16 %v444, %v443
    %v461 = vld [vmem:[%s4] sm:$0x1]
    %v463 = vlaneseq
    %v464 = vshrl.u32 %v463, 7
    %v465 = vsub.s32 0, %v464
    %v466 = vrot.slane %v461, %v465
    %468 = vmatprep.subr.bf16.mxu0 0
    %469 = vmatpush1.bf16.msra.mxu0 %v452
    %470 = vmatprep.subr.bf16.mxu0 0
    %471 = vmatpush1.bf16.msra.mxu0 %v451
    %472 = vmatprep.subr.bf16.mxu0 0
    %473 = vmatpush1.bf16.msra.mxu0 %v450
    %474 = vmatprep.subr.bf16.mxu0 0
    %475 = vmatpush1.bf16.msra.mxu0 %v449
    %476 = vmatprep.subr.bf16.mxu0 0
    %477 = vmatpush1.bf16.msra.mxu0 %v448
    %478 = vmatprep.subr.bf16.mxu0 0
    %479 = vmatpush1.bf16.msra.mxu0 %v447
    %480 = vmatprep.subr.bf16.mxu0 0
    %481 = vmatpush1.bf16.msra.mxu0 %v446
    %482 = vmatprep.subr.bf16.mxu0 0
    %483 = vmatpush1.bf16.msra.mxu0 %v445
    %484 = vmatprep.subr.bf16.mxu0 0
    %485 = vmatpush2.bf16.msra.mxu0 %v460
    %486 = vmatprep.subr.bf16.mxu0 0
    %487 = vmatpush2.bf16.msra.mxu0 %v459
    %488 = vmatprep.subr.bf16.mxu0 0
    %489 = vmatpush2.bf16.msra.mxu0 %v458
    %490 = vmatprep.subr.bf16.mxu0 0
    %491 = vmatpush2.bf16.msra.mxu0 %v457
    %492 = vmatprep.subr.bf16.mxu0 0
    %493 = vmatpush2.bf16.msra.mxu0 %v456
    %494 = vmatprep.subr.bf16.mxu0 0
    %495 = vmatpush2.bf16.msra.mxu0 %v455
    %496 = vmatprep.subr.bf16.mxu0 0
    %497 = vmatpush2.bf16.msra.mxu0 %v454
    %498 = vmatprep.subr.bf16.mxu0 0
    %499 = vmatpush2.bf16.msra.mxu0 %v453
    %500 = vmatprep.mubr.bf16.mxu0 %v302
    %501 = vmatmul.mubr.bf16.gmra.mxu0 %v301
    %v502 = vpop.f32.mrf.mxu0
    %v503 = vadd.f32 %v466, %v502
    %v504 = vpop.f32.mrf.mxu0
    %v505 = vpop.f32.mrf.mxu0
    %v506 = vadd.f32 %v466, %v505
    %v507 = vpop.f32.mrf.mxu0
    %508 = vmatprep.mubr.bf16.mxu0 %v304
    %509 = vmatmul.mubr.bf16.gmra.mxu0 %v303
    %v510 = vpop.f32.mrf.mxu0
    %v511 = vadd.f32 %v466, %v510
    %v512 = vpop.f32.mrf.mxu0
    %v513 = vpop.f32.mrf.mxu0
    %v514 = vadd.f32 %v466, %v513
    %v515 = vpop.f32.mrf.mxu0
    %516 = vmatprep.mubr.bf16.mxu0 %v306
    %517 = vmatmul.mubr.bf16.gmra.mxu0 %v305
    %v518 = vpop.f32.mrf.mxu0
    %v519 = vadd.f32 %v466, %v518
    %v520 = vpop.f32.mrf.mxu0
    %v521 = vpop.f32.mrf.mxu0
    %v522 = vadd.f32 %v466, %v521
    %v523 = vpop.f32.mrf.mxu0
    %524 = vmatprep.mubr.bf16.mxu0 %v308
    %525 = vmatmul.mubr.bf16.gmra.mxu0 %v307
    %v526 = vpop.f32.mrf.mxu0
    %v527 = vadd.f32 %v466, %v526
    %v528 = vpop.f32.mrf.mxu0
    %v529 = vpop.f32.mrf.mxu0
    %v530 = vadd.f32 %v466, %v529
    %v531 = vpop.f32.mrf.mxu0
    %532 = vmatprep.mubr.bf16.mxu0 %v310
    %533 = vmatmul.mubr.bf16.gmra.mxu0 %v309
    %v534 = vpop.f32.mrf.mxu0
    %v535 = vadd.f32 %v466, %v534
    %v536 = vpop.f32.mrf.mxu0
    %v537 = vpop.f32.mrf.mxu0
    %v538 = vadd.f32 %v466, %v537
    %v539 = vpop.f32.mrf.mxu0
    %540 = vmatprep.mubr.bf16.mxu0 %v312
    %541 = vmatmul.mubr.bf16.gmra.mxu0 %v311
    %v542 = vpop.f32.mrf.mxu0
    %v543 = vadd.f32 %v466, %v542
    %v544 = vpop.f32.mrf.mxu0
    %v545 = vpop.f32.mrf.mxu0
    %v546 = vadd.f32 %v466, %v545
    %v547 = vpop.f32.mrf.mxu0
    %548 = vmatprep.mubr.bf16.mxu0 %v314
    %549 = vmatmul.mubr.bf16.gmra.mxu0 %v313
    %v550 = vpop.f32.mrf.mxu0
    %v551 = vadd.f32 %v466, %v550
    %v552 = vpop.f32.mrf.mxu0
    %v553 = vpop.f32.mrf.mxu0
    %v554 = vadd.f32 %v466, %v553
    %v555 = vpop.f32.mrf.mxu0
    %556 = vmatprep.mubr.bf16.mxu0 %v316
    %557 = vmatmul.mubr.bf16.gmra.mxu0 %v315
    %v558 = vpop.f32.mrf.mxu0
    %v559 = vadd.f32 %v466, %v558
    %v560 = vpop.f32.mrf.mxu0
    %v561 = vpop.f32.mrf.mxu0
    %v562 = vadd.f32 %v466, %v561
    %v563 = vpop.f32.mrf.mxu0
    %564 = vdwg.mxu0
    %565 = vxpose.xlu0.b32.start [1/16] %v503, 128
    %566 = vxpose.xlu0.b32.cont [2/16] %v506, 128
    %567 = vxpose.xlu0.b32.cont [3/16] %v511, 128
    %568 = vxpose.xlu0.b32.cont [4/16] %v514, 128
    %569 = vxpose.xlu0.b32.cont [5/16] %v519, 128
    %570 = vxpose.xlu0.b32.cont [6/16] %v522, 128
    %571 = vxpose.xlu0.b32.cont [7/16] %v527, 128
    %572 = vxpose.xlu0.b32.cont [8/16] %v530, 128
    %573 = vxpose.xlu0.b32.cont [9/16] %v535, 128
    %574 = vxpose.xlu0.b32.cont [10/16] %v538, 128
    %575 = vxpose.xlu0.b32.cont [11/16] %v543, 128
    %576 = vxpose.xlu0.b32.cont [12/16] %v546, 128
    %577 = vxpose.xlu0.b32.cont [13/16] %v551, 128
    %578 = vxpose.xlu0.b32.cont [14/16] %v554, 128
    %579 = vxpose.xlu0.b32.cont [15/16] %v559, 128
    %580 = vxpose.xlu0.b32.end [16/16] %v562, 128
    %v581 = vpop.trf.xlu0
    %v582 = vpop.trf.xlu0
    %v583 = vpop.trf.xlu0
    %v584 = vpop.trf.xlu0
    %v585 = vpop.trf.xlu0
    %v586 = vpop.trf.xlu0
    %v587 = vpop.trf.xlu0
    %v588 = vpop.trf.xlu0
    %v589 = vpop.trf.xlu0
    %v590 = vpop.trf.xlu0
    %v591 = vpop.trf.xlu0
    %v592 = vpop.trf.xlu0
    %v593 = vpop.trf.xlu0
    %v594 = vpop.trf.xlu0
    %v595 = vpop.trf.xlu0
    %v596 = vpop.trf.xlu0
    %597 = vst [vmem:[%s6] sm:$0xff] %v581
    // Predicated region
    $region22: #{lswt_pooler_forward.1} parent=1 // pred_check
      _
    $region23: #{lswt_pooler_forward.1} parent=1 // pred_check_branch
      %599 = sbr.rel (0) target = $region25
    $region24: #{lswt_pooler_forward.1} parent=1 // pred_region
      %s601 = ssub.s32 2048, 2048
      %602 = vsyncadd [#allocation3], %s601
      %s603 = sshll.u32 [#allocation2], 4
      %s604 = int_to_ptr.vmem [resolvable:$true] %s603
      %609 = dma.vmem_to_hbm [thread:$0]  %s604, 2048, %s5, [#allocation3], 128, 128, 8
    $region25: #{lswt_pooler_forward.1} parent=1 // pred_fallthru
      _
    // Predicated region
    $region26: #{lswt_pooler_forward.1} parent=1 // pred_check
      _
    $region27: #{lswt_pooler_forward.1} parent=1 // pred_check_branch
      %611 = sbr.rel (0) target = $region29
    $region28: #{lswt_pooler_forward.1} parent=1 // pred_region
      _
    $region29: #{lswt_pooler_forward.1} parent=1 // pred_fallthru
      _
    // Predicated region
    $region30: #{lswt_pooler_forward.1} parent=1 // pred_check
      _
    $region31: #{lswt_pooler_forward.1} parent=1 // pred_check_branch
      %613 = sbr.rel (0) target = $region33
    $region32: #{lswt_pooler_forward.1} parent=1 // pred_region
      %614 = dma.done [#allocation3], 2048
    $region33: #{lswt_pooler_forward.1} parent=1 // pred_fallthru
      _
    // Predicated region
    $region34: #{lswt_pooler_forward.1} parent=1 // pred_check
      _
    $region35: #{lswt_pooler_forward.1} parent=1 // pred_check_branch
      %616 = sbr.rel (0) target = $region37
    $region36: #{lswt_pooler_forward.1} parent=1 // pred_region
      _
    $region37: #{lswt_pooler_forward.1} parent=1 // pred_fallthru
      _
    %617 = vsyncpa [#allocation3], 1

</llo_original>
